<compile_context>
chip_gen: v7x
topology: tpu7x:2x2x1
jax: 0.10.0
libtpu: 0.0.40
codegen_flags: <defaults>
</compile_context>

<pallas_src>
import math

import jax
import jax.numpy as jnp
import numpy as np
from jax.experimental import pallas as pl
from jax.experimental.pallas import tpu as pltpu


def _round_up(x, m):
    return (x + m - 1) // m * m


def _conv_matmul_kernel(x_ref, w_ref, b_ref, o_ref, acc_ref):
    """One (TM, TN) output tile of  O = X @ W + b  with K-axis grid accumulation.

    x_ref:   (TM, TK)  im2col patch tile           (VMEM, auto-pipelined)
    w_ref:   (TK, TN)  folded conv-weight tile     (VMEM, auto-pipelined)
    b_ref:   (1, TN)   bias tile                   (VMEM)
    o_ref:   (TM, TN)  output tile (lane-dense, TN multiple of 128)
    acc_ref: (TM, TN)  f32 VMEM scratch accumulator (persists across K steps)
    """
    k = pl.program_id(2)

    @pl.when(k == 0)
    def _init():
        # Seed the accumulator with the broadcast bias: no extra bias pass later.
        acc_ref[...] = jnp.broadcast_to(b_ref[...], acc_ref.shape)

    acc_ref[...] += jnp.dot(x_ref[...], w_ref[...],
                            preferred_element_type=jnp.float32)

    @pl.when(k == pl.num_programs(2) - 1)
    def _finalize():
        o_ref[...] = acc_ref[...].astype(o_ref.dtype)


def pred_conv_forward(x_nchw, weight_oihw, bias, padding,
                      tile_m=512, tile_n=128, tile_k=512):
    """Forward pass matching nn.Conv2d(in_ch, out_ch, kernel_size, padding), NCHW API."""
    N, Cin, H, W = x_nchw.shape
    Cout, Cin_w, KH, KW = weight_oihw.shape
    assert Cin == Cin_w, "groups != 1 not supported"
    Hout = H + 2 * padding - KH + 1
    Wout = W + 2 * padding - KW + 1

    # ---- Tap folding (im2col) in the wrapper: contraction dim K = KH*KW*Cin -------
    x_nhwc = jnp.transpose(x_nchw, (0, 2, 3, 1))
    x_pad = jnp.pad(x_nhwc,
                    ((0, 0), (padding, padding), (padding, padding), (0, 0)))
    taps = []
    for kh in range(KH):                     # static, small unrolled loop (XLA side)
        for kw in range(KW):
            taps.append(x_pad[:, kh:kh + Hout, kw:kw + Wout, :])   # (N, Hout, Wout, Cin)
    cols = jnp.concatenate(taps, axis=-1)                          # (N, Hout, Wout, KH*KW*Cin)

    M = N * Hout * Wout
    Kdim = KH * KW * Cin
    cols2d = cols.reshape(M, Kdim)

    # Weight OIHW -> (KH, KW, Cin, Cout) -> (KH*KW*Cin, Cout); matches cols ordering.
    w_flat = jnp.transpose(weight_oihw, (2, 3, 1, 0)).reshape(Kdim, Cout)
    b2d = bias.reshape(1, Cout)

    # ---- Pad to lane/tile-friendly sizes (zeros contribute nothing to the dot) ----
    # Lane-dense: K and Cout up to multiples of 128, M up to a multiple of 8.
    TN = min(tile_n, _round_up(Cout, 128))
    TK = min(tile_k, _round_up(Kdim, 128))     # collapses K-grid to 1 step when K is small
    TM = min(tile_m, _round_up(M, 8))
    Mp = _round_up(M, TM)
    Kp = _round_up(Kdim, TK)
    Np = _round_up(Cout, TN)

    cols2d = jnp.pad(cols2d, ((0, Mp - M), (0, Kp - Kdim)))
    w_flat = jnp.pad(w_flat, ((0, Kp - Kdim), (0, Np - Cout)))
    b2d = jnp.pad(b2d, ((0, 0), (0, Np - Cout)))

    grid = (Mp // TM, Np // TN, Kp // TK)

    flops = 2.0 * Mp * Kp * Np
    bytes_accessed = 4.0 * (Mp * Kp + Kp * Np + Mp * Np + Np)

    out2d = pl.pallas_call(
        _conv_matmul_kernel,
        out_shape=jax.ShapeDtypeStruct((Mp, Np), jnp.float32),
        grid_spec=pltpu.PrefetchScalarGridSpec(
            num_scalar_prefetch=0,
            grid=grid,
            in_specs=[
                pl.BlockSpec((TM, TK), lambda i, j, k: (i, k)),   # im2col patches
                pl.BlockSpec((TK, TN), lambda i, j, k: (k, j)),   # folded weights
                pl.BlockSpec((1, TN), lambda i, j, k: (0, j)),    # bias
            ],
            out_specs=pl.BlockSpec((TM, TN), lambda i, j, k: (i, j)),
            scratch_shapes=[pltpu.VMEM((TM, TN), jnp.float32)],
        ),
        compiler_params=pltpu.CompilerParams(
            dimension_semantics=("parallel", "parallel", "arbitrary"),
            vmem_limit_bytes=32 * 1024 * 1024,
        ),
        cost_estimate=pl.CostEstimate(flops=int(flops), transcendentals=0,
                                      bytes_accessed=int(bytes_accessed)),
    )(cols2d, w_flat, b2d)

    # Strip padding, back to NCHW to match the PyTorch module's output convention.
    out = out2d[:M, :Cout].reshape(N, Hout, Wout, Cout)
    return jnp.transpose(out, (0, 3, 1, 2))


def xavier_uniform(key, shape):
    """Matches nn.init.xavier_uniform_ for a Conv2d weight of shape (Cout, Cin, KH, KW)."""
    cout, cin, kh, kw = shape
    fan_in = cin * kh * kw
    fan_out = cout * kh * kw
    bound = math.sqrt(6.0 / (fan_in + fan_out))
    return jax.random.uniform(key, shape, jnp.float32, -bound, bound)


if __name__ == "__main__":
    # Small deterministic example consistent with the module.
    N, Cin, H, W = 2, 4, 16, 16
    Cout, K, pad = 8, 3, 1

    key = jax.random.PRNGKey(0)
    kx, kw = jax.random.split(key)

    x = jax.random.normal(kx, (N, Cin, H, W), jnp.float32)
    weight = xavier_uniform(kw, (Cout, Cin, K, K))          # nn.init.xavier_uniform_
    bias = jnp.zeros((Cout,), jnp.float32)                  # bias zeroed in init_weights

    out = pred_conv_forward(x, weight, bias, pad)
    out = jax.block_until_ready(out)

    # Sanity check against XLA's conv (same NCHW semantics as PyTorch).
    ref = jax.lax.conv_general_dilated(
        x, weight, window_strides=(1, 1), padding=[(pad, pad), (pad, pad)],
        dimension_numbers=("NCHW", "OIHW", "NCHW"),
    ) + bias.reshape(1, Cout, 1, 1)
    np.testing.assert_allclose(np.asarray(out), np.asarray(ref), rtol=1e-4, atol=1e-4)

    print("KERNEL_OK")
</pallas_src>

<mosaic_0001>
module attributes {stable_mosaic.version = 11 : i64} {
  func.func @_conv_matmul_kernel(%arg0: i32, %arg1: i32, %arg2: i32, %arg3: memref<512x128xf32, #tpu.memory_space<vmem>>, %arg4: memref<128x128xf32, #tpu.memory_space<vmem>>, %arg5: memref<1x128xf32, #tpu.memory_space<vmem>>, %arg6: memref<512x128xf32, #tpu.memory_space<vmem>>, %arg7: memref<512x128xf32, #tpu.memory_space<vmem>>) attributes {dimension_semantics = [#tpu.dimension_semantics<parallel>, #tpu.dimension_semantics<parallel>, #tpu.dimension_semantics<arbitrary>], iteration_bounds = array<i64: 1, 1, 1>, scalar_prefetch = 0 : i64, scratch_operands = 1 : i64, tpu.core_type = #tpu.core_type<tc>, window_params = [{transform_indices = @transform_0, window_bounds = array<i64: 512, 128>}, {transform_indices = @transform_1, window_bounds = array<i64: 128, 128>}, {transform_indices = @transform_2, window_bounds = array<i64: 1, 128>}, {transform_indices = @transform_3, window_bounds = array<i64: 512, 128>}]} {
    %c0_i32 = arith.constant 0 : i32
    %0 = arith.cmpi eq, %arg2, %c0_i32 : i32
    %1 = arith.extui %0 : i1 to i32
    %c0_i32_0 = arith.constant 0 : i32
    %2 = arith.cmpi ne, %1, %c0_i32_0 : i32
    scf.if %2 {
      %c0_10 = arith.constant 0 : index
      %c0_11 = arith.constant 0 : index
      %12 = vector.load %arg5[%c0_10, %c0_11] : memref<1x128xf32, #tpu.memory_space<vmem>>, vector<1x128xf32>
      %13 = vector.shape_cast %12 : vector<1x128xf32> to vector<1x128xf32>
      %14 = vector.broadcast %13 : vector<1x128xf32> to vector<512x128xf32>
      %c0_12 = arith.constant 0 : index
      %c0_13 = arith.constant 0 : index
      %15 = vector.load %arg7[%c0_12, %c0_13] : memref<512x128xf32, #tpu.memory_space<vmem>>, vector<512x128xf32>
      tpu.vector_store %arg7[%c0_12, %c0_13], %14 {strides = array<i32>} : memref<512x128xf32, #tpu.memory_space<vmem>>, vector<512x128xf32>,
    } else {
    }
    %c0 = arith.constant 0 : index
    %c0_1 = arith.constant 0 : index
    %3 = vector.load %arg7[%c0, %c0_1] : memref<512x128xf32, #tpu.memory_space<vmem>>, vector<512x128xf32>
    %c0_2 = arith.constant 0 : index
    %c0_3 = arith.constant 0 : index
    %4 = vector.load %arg3[%c0_2, %c0_3] : memref<512x128xf32, #tpu.memory_space<vmem>>, vector<512x128xf32>
    %c0_4 = arith.constant 0 : index
    %c0_5 = arith.constant 0 : index
    %5 = vector.load %arg4[%c0_4, %c0_5] : memref<128x128xf32, #tpu.memory_space<vmem>>, vector<128x128xf32>
    %cst = arith.constant dense<0.000000e+00> : vector<512x128xf32>
    %6 = tpu.matmul %4, %5, %cst {dimension_numbers = #tpu.dot_dimension_numbers<[1], [0], [0], [1], [0, 0, 1, 1], [], []>} : vector<512x128xf32>, vector<128x128xf32>, vector<512x128xf32> -> vector<512x128xf32>
    %7 = arith.addf %3, %6 : vector<512x128xf32>
    %c0_6 = arith.constant 0 : index
    %c0_7 = arith.constant 0 : index
    %8 = vector.load %arg7[%c0_6, %c0_7] : memref<512x128xf32, #tpu.memory_space<vmem>>, vector<512x128xf32>
    tpu.vector_store %arg7[%c0_6, %c0_7], %7 {strides = array<i32>} : memref<512x128xf32, #tpu.memory_space<vmem>>, vector<512x128xf32>,
    %c0_i32_8 = arith.constant 0 : i32
    %9 = arith.cmpi eq, %arg2, %c0_i32_8 : i32
    %10 = arith.extui %9 : i1 to i32
    %c0_i32_9 = arith.constant 0 : i32
    %11 = arith.cmpi ne, %10, %c0_i32_9 : i32
    scf.if %11 {
      %c0_10 = arith.constant 0 : index
      %c0_11 = arith.constant 0 : index
      %12 = vector.load %arg7[%c0_10, %c0_11] : memref<512x128xf32, #tpu.memory_space<vmem>>, vector<512x128xf32>
      %c0_12 = arith.constant 0 : index
      %c0_13 = arith.constant 0 : index
      %13 = vector.load %arg6[%c0_12, %c0_13] : memref<512x128xf32, #tpu.memory_space<vmem>>, vector<512x128xf32>
      tpu.vector_store %arg6[%c0_12, %c0_13], %12 {strides = array<i32>} : memref<512x128xf32, #tpu.memory_space<vmem>>, vector<512x128xf32>,
    } else {
    }
    return
  }
  func.func @transform_0(%arg0: i32, %arg1: i32, %arg2: i32) -> (i32, i32) {
    %c0_i32 = arith.constant 0 : i32
    return %arg0, %arg2 : i32, i32
  }
  func.func @transform_1(%arg0: i32, %arg1: i32, %arg2: i32) -> (i32, i32) {
    %c0_i32 = arith.constant 0 : i32
    return %arg2, %arg1 : i32, i32
  }
  func.func @transform_2(%arg0: i32, %arg1: i32, %arg2: i32) -> (i32, i32) {
    %c0_i32 = arith.constant 0 : i32
    %c0_i32_0 = arith.constant 0 : i32
    return %c0_i32, %arg1 : i32, i32
  }
  func.func @transform_3(%arg0: i32, %arg1: i32, %arg2: i32) -> (i32, i32) {
    %c0_i32 = arith.constant 0 : i32
    return %arg0, %arg1 : i32, i32
  }
}

</mosaic_0001>

<llo_original>
// kernel: tpu_custom_call.1
$region0: #{tpu_custom_call.1}
  #allocation0 [shape = 'u32[]', space=smem, size = 0x4, offset = 0x4, fixed_abs, tag = 'smem constant byte address 0x4 - core index']
  #allocation1 [shape = 'u32[144,128]{1,0:T(1,128)}', space=vmem, size = 0x12000, scoped, tag = 'internal scratch']
  #allocation2 [shape = 'f32[512,128]{1,0:T(8,128)}', space=vmem, size = 0x40000, scoped, tag = 'scratch operand']
  %s0 = inlined_call_operand.hbm [shape: f32[512,128], index: 0, kind: input, shape index: {}]
  %s1 = inlined_call_operand.hbm [shape: f32[128,128], index: 1, kind: input, shape index: {}]
  %s2 = inlined_call_operand.vmem [shape: f32[1,128], index: 2, kind: input, shape index: {}]
  %s3 = inlined_call_operand.hbm [shape: f32[512,128], index: 3, kind: output, shape index: {}]
  %s4 = sld [smem:[#allocation0]]
  $region38: #{tpu_custom_call.1} parent=0
    _
  %s6 = ssub.s32 1, %s4
  %s7 = scalar_select 0, %s6, %s4
  $region1: #{tpu_custom_call.1} parent=0
    #allocation3 [shape = 'u8[262144]{0}', space=vmem, size = 0x40000, scoped, tag = 'input window, operand 0, single buffered']
    #allocation4 [shape = 's32[1]{0}', space=sflag, size = 0x4, scoped, tag = 'scoped memory for tpu_custom_call.1']
    #allocation5 [shape = 's32[1]{0}', space=sflag, size = 0x4, scoped, tag = 'scoped memory for tpu_custom_call.1']
    #allocation6 [shape = 'u8[65536]{0}', space=vmem, size = 0x10000, scoped, tag = 'input window, operand 1, single buffered']
    #allocation7 [shape = 's32[1]{0}', space=sflag, size = 0x4, scoped, tag = 'scoped memory for tpu_custom_call.1']
    #allocation8 [shape = 'u8[262144]{0}', space=vmem, size = 0x40000, scoped, tag = 'output window, operand 0, single buffered']
    %8 = vsyncpa [#allocation4], 0
    %9 = vsyncpa [#allocation7], 0
    %10 = vsyncpa [#allocation5], 0
    // Predicated region
    $region2: #{tpu_custom_call.1} parent=1 // pred_check
      _
    $region3: #{tpu_custom_call.1} parent=1 // pred_check_branch
      %12 = sbr.rel (0) target = $region5
    $region4: #{tpu_custom_call.1} parent=1 // pred_region
      %s14 = ssub.s32 8192, 8192
      %15 = vsyncadd [#allocation4], %s14
      %s16 = sshll.u32 [#allocation3], 4
      %s17 = int_to_ptr.vmem [resolvable:$true] %s16
      %22 = dma.hbm_to_vmem [thread:$0]  %s0, 8192, %s17, [#allocation4], 128, 128, 8
    $region5: #{tpu_custom_call.1} parent=1 // pred_fallthru
      _
    // Predicated region
    $region6: #{tpu_custom_call.1} parent=1 // pred_check
      _
    $region7: #{tpu_custom_call.1} parent=1 // pred_check_branch
      %24 = sbr.rel (0) target = $region9
    $region8: #{tpu_custom_call.1} parent=1 // pred_region
      %s26 = ssub.s32 2048, 2048
      %27 = vsyncadd [#allocation7], %s26
      %s28 = sshll.u32 [#allocation6], 4
      %s29 = int_to_ptr.vmem [resolvable:$true] %s28
      %34 = dma.hbm_to_vmem [thread:$0]  %s1, 2048, %s29, [#allocation7], 128, 128, 8
    $region9: #{tpu_custom_call.1} parent=1 // pred_fallthru
      _
    // Predicated region
    $region10: #{tpu_custom_call.1} parent=1 // pred_check
      _
    $region11: #{tpu_custom_call.1} parent=1 // pred_check_branch
      %36 = sbr.rel (0) target = $region13
    $region12: #{tpu_custom_call.1} parent=1 // pred_region
      _
    $region13: #{tpu_custom_call.1} parent=1 // pred_fallthru
      _
    // Predicated region
    $region14: #{tpu_custom_call.1} parent=1 // pred_check
      _
    $region15: #{tpu_custom_call.1} parent=1 // pred_check_branch
      %38 = sbr.rel (0) target = $region17
    $region16: #{tpu_custom_call.1} parent=1 // pred_region
      %39 = dma.done [#allocation4], 8192
    $region17: #{tpu_custom_call.1} parent=1 // pred_fallthru
      _
    // Predicated region
    $region18: #{tpu_custom_call.1} parent=1 // pred_check
      _
    $region19: #{tpu_custom_call.1} parent=1 // pred_check_branch
      %41 = sbr.rel (0) target = $region21
    $region20: #{tpu_custom_call.1} parent=1 // pred_region
      %42 = dma.done [#allocation7], 2048
    $region21: #{tpu_custom_call.1} parent=1 // pred_fallthru
      _
    %p43 = scmp.eq.s32.totalorder 0, 0
    // Predicated region
    $region22: #{tpu_custom_call.1} parent=1 // pred_check
      %p44 = pneg %p43
    $region23: #{tpu_custom_call.1} parent=1 // pred_check_branch
      %46 = sbr.rel (%p44) target = $region25
    $region24: #{tpu_custom_call.1} parent=1 // pred_region
      %v47 = vld [vmem:[%s2] sm:$0x1]
      %v49 = vlaneseq
      %v50 = vshrl.u32 %v49, 7
      %v51 = vsub.s32 0, %v50
      %v52 = vrot.slane %v47, %v51
      %54 = vst [vmem:[#allocation2] sm:$0xff] %v52
      %55 = vst [vmem:[#allocation2 + $0x8] sm:$0xff] %v52
      %56 = vst [vmem:[#allocation2 + $0x10] sm:$0xff] %v52
      %57 = vst [vmem:[#allocation2 + $0x18] sm:$0xff] %v52
      %58 = vst [vmem:[#allocation2 + $0x20] sm:$0xff] %v52
      %59 = vst [vmem:[#allocation2 + $0x28] sm:$0xff] %v52
      %60 = vst [vmem:[#allocation2 + $0x30] sm:$0xff] %v52
      %61 = vst [vmem:[#allocation2 + $0x38] sm:$0xff] %v52
      %62 = vst [vmem:[#allocation2 + $0x40] sm:$0xff] %v52
      %63 = vst [vmem:[#allocation2 + $0x48] sm:$0xff] %v52
      %64 = vst [vmem:[#allocation2 + $0x50] sm:$0xff] %v52
      %65 = vst [vmem:[#allocation2 + $0x58] sm:$0xff] %v52
      %66 = vst [vmem:[#allocation2 + $0x60] sm:$0xff] %v52
      %67 = vst [vmem:[#allocation2 + $0x68] sm:$0xff] %v52
      %68 = vst [vmem:[#allocation2 + $0x70] sm:$0xff] %v52
      %69 = vst [vmem:[#allocation2 + $0x78] sm:$0xff] %v52
      %70 = vst [vmem:[#allocation2 + $0x80] sm:$0xff] %v52
      %71 = vst [vmem:[#allocation2 + $0x88] sm:$0xff] %v52
      %72 = vst [vmem:[#allocation2 + $0x90] sm:$0xff] %v52
      %73 = vst [vmem:[#allocation2 + $0x98] sm:$0xff] %v52
      %74 = vst [vmem:[#allocation2 + $0xa0] sm:$0xff] %v52
      %75 = vst [vmem:[#allocation2 + $0xa8] sm:$0xff] %v52
      %76 = vst [vmem:[#allocation2 + $0xb0] sm:$0xff] %v52
      %77 = vst [vmem:[#allocation2 + $0xb8] sm:$0xff] %v52
      %78 = vst [vmem:[#allocation2 + $0xc0] sm:$0xff] %v52
      %79 = vst [vmem:[#allocation2 + $0xc8] sm:$0xff] %v52
      %80 = vst [vmem:[#allocation2 + $0xd0] sm:$0xff] %v52
      %81 = vst [vmem:[#allocation2 + $0xd8] sm:$0xff] %v52
      %82 = vst [vmem:[#allocation2 + $0xe0] sm:$0xff] %v52
      %83 = vst [vmem:[#allocation2 + $0xe8] sm:$0xff] %v52
      %84 = vst [vmem:[#allocation2 + $0xf0] sm:$0xff] %v52
      %85 = vst [vmem:[#allocation2 + $0xf8] sm:$0xff] %v52
      %86 = vst [vmem:[#allocation2 + $0x100] sm:$0xff] %v52
      %87 = vst [vmem:[#allocation2 + $0x108] sm:$0xff] %v52
      %88 = vst [vmem:[#allocation2 + $0x110] sm:$0xff] %v52
      %89 = vst [vmem:[#allocation2 + $0x118] sm:$0xff] %v52
      %90 = vst [vmem:[#allocation2 + $0x120] sm:$0xff] %v52
      %91 = vst [vmem:[#allocation2 + $0x128] sm:$0xff] %v52
      %92 = vst [vmem:[#allocation2 + $0x130] sm:$0xff] %v52
      %93 = vst [vmem:[#allocation2 + $0x138] sm:$0xff] %v52
      %94 = vst [vmem:[#allocation2 + $0x140] sm:$0xff] %v52
      %95 = vst [vmem:[#allocation2 + $0x148] sm:$0xff] %v52
      %96 = vst [vmem:[#allocation2 + $0x150] sm:$0xff] %v52
      %97 = vst [vmem:[#allocation2 + $0x158] sm:$0xff] %v52
      %98 = vst [vmem:[#allocation2 + $0x160] sm:$0xff] %v52
      %99 = vst [vmem:[#allocation2 + $0x168] sm:$0xff] %v52
      %100 = vst [vmem:[#allocation2 + $0x170] sm:$0xff] %v52
      %101 = vst [vmem:[#allocation2 + $0x178] sm:$0xff] %v52
      %102 = vst [vmem:[#allocation2 + $0x180] sm:$0xff] %v52
      %103 = vst [vmem:[#allocation2 + $0x188] sm:$0xff] %v52
      %104 = vst [vmem:[#allocation2 + $0x190] sm:$0xff] %v52
      %105 = vst [vmem:[#allocation2 + $0x198] sm:$0xff] %v52
      %106 = vst [vmem:[#allocation2 + $0x1a0] sm:$0xff] %v52
      %107 = vst [vmem:[#allocation2 + $0x1a8] sm:$0xff] %v52
      %108 = vst [vmem:[#allocation2 + $0x1b0] sm:$0xff] %v52
      %109 = vst [vmem:[#allocation2 + $0x1b8] sm:$0xff] %v52
      %110 = vst [vmem:[#allocation2 + $0x1c0] sm:$0xff] %v52
      %111 = vst [vmem:[#allocation2 + $0x1c8] sm:$0xff] %v52
      %112 = vst [vmem:[#allocation2 + $0x1d0] sm:$0xff] %v52
      %113 = vst [vmem:[#allocation2 + $0x1d8] sm:$0xff] %v52
      %114 = vst [vmem:[#allocation2 + $0x1e0] sm:$0xff] %v52
      %115 = vst [vmem:[#allocation2 + $0x1e8] sm:$0xff] %v52
      %116 = vst [vmem:[#allocation2 + $0x1f0] sm:$0xff] %v52
      %117 = vst [vmem:[#allocation2 + $0x1f8] sm:$0xff] %v52
    $region25: #{tpu_custom_call.1} parent=1 // pred_fallthru
      _
    %v118 = vld [vmem:[#allocation2] sm:$0xff]
    %v119 = vld [vmem:[#allocation2 + $0x8] sm:$0xff]
    %v120 = vld [vmem:[#allocation2 + $0x10] sm:$0xff]
    %v121 = vld [vmem:[#allocation2 + $0x18] sm:$0xff]
    %v122 = vld [vmem:[#allocation2 + $0x20] sm:$0xff]
    %v123 = vld [vmem:[#allocation2 + $0x28] sm:$0xff]
    %v124 = vld [vmem:[#allocation2 + $0x30] sm:$0xff]
    %v125 = vld [vmem:[#allocation2 + $0x38] sm:$0xff]
    %v126 = vld [vmem:[#allocation2 + $0x40] sm:$0xff]
    %v127 = vld [vmem:[#allocation2 + $0x48] sm:$0xff]
    %v128 = vld [vmem:[#allocation2 + $0x50] sm:$0xff]
    %v129 = vld [vmem:[#allocation2 + $0x58] sm:$0xff]
    %v130 = vld [vmem:[#allocation2 + $0x60] sm:$0xff]
    %v131 = vld [vmem:[#allocation2 + $0x68] sm:$0xff]
    %v132 = vld [vmem:[#allocation2 + $0x70] sm:$0xff]
    %v133 = vld [vmem:[#allocation2 + $0x78] sm:$0xff]
    %v134 = vld [vmem:[#allocation2 + $0x80] sm:$0xff]
    %v135 = vld [vmem:[#allocation2 + $0x88] sm:$0xff]
    %v136 = vld [vmem:[#allocation2 + $0x90] sm:$0xff]
    %v137 = vld [vmem:[#allocation2 + $0x98] sm:$0xff]
    %v138 = vld [vmem:[#allocation2 + $0xa0] sm:$0xff]
    %v139 = vld [vmem:[#allocation2 + $0xa8] sm:$0xff]
    %v140 = vld [vmem:[#allocation2 + $0xb0] sm:$0xff]
    %v141 = vld [vmem:[#allocation2 + $0xb8] sm:$0xff]
    %v142 = vld [vmem:[#allocation2 + $0xc0] sm:$0xff]
    %v143 = vld [vmem:[#allocation2 + $0xc8] sm:$0xff]
    %v144 = vld [vmem:[#allocation2 + $0xd0] sm:$0xff]
    %v145 = vld [vmem:[#allocation2 + $0xd8] sm:$0xff]
    %v146 = vld [vmem:[#allocation2 + $0xe0] sm:$0xff]
    %v147 = vld [vmem:[#allocation2 + $0xe8] sm:$0xff]
    %v148 = vld [vmem:[#allocation2 + $0xf0] sm:$0xff]
    %v149 = vld [vmem:[#allocation2 + $0xf8] sm:$0xff]
    %v150 = vld [vmem:[#allocation2 + $0x100] sm:$0xff]
    %v151 = vld [vmem:[#allocation2 + $0x108] sm:$0xff]
    %v152 = vld [vmem:[#allocation2 + $0x110] sm:$0xff]
    %v153 = vld [vmem:[#allocation2 + $0x118] sm:$0xff]
    %v154 = vld [vmem:[#allocation2 + $0x120] sm:$0xff]
    %v155 = vld [vmem:[#allocation2 + $0x128] sm:$0xff]
    %v156 = vld [vmem:[#allocation2 + $0x130] sm:$0xff]
    %v157 = vld [vmem:[#allocation2 + $0x138] sm:$0xff]
    %v158 = vld [vmem:[#allocation2 + $0x140] sm:$0xff]
    %v159 = vld [vmem:[#allocation2 + $0x148] sm:$0xff]
    %v160 = vld [vmem:[#allocation2 + $0x150] sm:$0xff]
    %v161 = vld [vmem:[#allocation2 + $0x158] sm:$0xff]
    %v162 = vld [vmem:[#allocation2 + $0x160] sm:$0xff]
    %v163 = vld [vmem:[#allocation2 + $0x168] sm:$0xff]
    %v164 = vld [vmem:[#allocation2 + $0x170] sm:$0xff]
    %v165 = vld [vmem:[#allocation2 + $0x178] sm:$0xff]
    %v166 = vld [vmem:[#allocation2 + $0x180] sm:$0xff]
    %v167 = vld [vmem:[#allocation2 + $0x188] sm:$0xff]
    %v168 = vld [vmem:[#allocation2 + $0x190] sm:$0xff]
    %v169 = vld [vmem:[#allocation2 + $0x198] sm:$0xff]
    %v170 = vld [vmem:[#allocation2 + $0x1a0] sm:$0xff]
    %v171 = vld [vmem:[#allocation2 + $0x1a8] sm:$0xff]
    %v172 = vld [vmem:[#allocation2 + $0x1b0] sm:$0xff]
    %v173 = vld [vmem:[#allocation2 + $0x1b8] sm:$0xff]
    %v174 = vld [vmem:[#allocation2 + $0x1c0] sm:$0xff]
    %v175 = vld [vmem:[#allocation2 + $0x1c8] sm:$0xff]
    %v176 = vld [vmem:[#allocation2 + $0x1d0] sm:$0xff]
    %v177 = vld [vmem:[#allocation2 + $0x1d8] sm:$0xff]
    %v178 = vld [vmem:[#allocation2 + $0x1e0] sm:$0xff]
    %v179 = vld [vmem:[#allocation2 + $0x1e8] sm:$0xff]
    %v180 = vld [vmem:[#allocation2 + $0x1f0] sm:$0xff]
    %v181 = vld [vmem:[#allocation2 + $0x1f8] sm:$0xff]
    %v182 = vld [vmem:[#allocation3] sm:$0xff]
    %v183 = vld [vmem:[#allocation3 + $0x8] sm:$0xff]
    %v184 = vld [vmem:[#allocation3 + $0x10] sm:$0xff]
    %v185 = vld [vmem:[#allocation3 + $0x18] sm:$0xff]
    %v186 = vld [vmem:[#allocation3 + $0x20] sm:$0xff]
    %v187 = vld [vmem:[#allocation3 + $0x28] sm:$0xff]
    %v188 = vld [vmem:[#allocation3 + $0x30] sm:$0xff]
    %v189 = vld [vmem:[#allocation3 + $0x38] sm:$0xff]
    %v190 = vld [vmem:[#allocation3 + $0x40] sm:$0xff]
    %v191 = vld [vmem:[#allocation3 + $0x48] sm:$0xff]
    %v192 = vld [vmem:[#allocation3 + $0x50] sm:$0xff]
    %v193 = vld [vmem:[#allocation3 + $0x58] sm:$0xff]
    %v194 = vld [vmem:[#allocation3 + $0x60] sm:$0xff]
    %v195 = vld [vmem:[#allocation3 + $0x68] sm:$0xff]
    %v196 = vld [vmem:[#allocation3 + $0x70] sm:$0xff]
    %v197 = vld [vmem:[#allocation3 + $0x78] sm:$0xff]
    %v198 = vld [vmem:[#allocation3 + $0x80] sm:$0xff]
    %v199 = vld [vmem:[#allocation3 + $0x88] sm:$0xff]
    %v200 = vld [vmem:[#allocation3 + $0x90] sm:$0xff]
    %v201 = vld [vmem:[#allocation3 + $0x98] sm:$0xff]
    %v202 = vld [vmem:[#allocation3 + $0xa0] sm:$0xff]
    %v203 = vld [vmem:[#allocation3 + $0xa8] sm:$0xff]
    %v204 = vld [vmem:[#allocation3 + $0xb0] sm:$0xff]
    %v205 = vld [vmem:[#allocation3 + $0xb8] sm:$0xff]
    %v206 = vld [vmem:[#allocation3 + $0xc0] sm:$0xff]
    %v207 = vld [vmem:[#allocation3 + $0xc8] sm:$0xff]
    %v208 = vld [vmem:[#allocation3 + $0xd0] sm:$0xff]
    %v209 = vld [vmem:[#allocation3 + $0xd8] sm:$0xff]
    %v210 = vld [vmem:[#allocation3 + $0xe0] sm:$0xff]
    %v211 = vld [vmem:[#allocation3 + $0xe8] sm:$0xff]
    %v212 = vld [vmem:[#allocation3 + $0xf0] sm:$0xff]
    %v213 = vld [vmem:[#allocation3 + $0xf8] sm:$0xff]
    %v214 = vld [vmem:[#allocation3 + $0x100] sm:$0xff]
    %v215 = vld [vmem:[#allocation3 + $0x108] sm:$0xff]
    %v216 = vld [vmem:[#allocation3 + $0x110] sm:$0xff]
    %v217 = vld [vmem:[#allocation3 + $0x118] sm:$0xff]
    %v218 = vld [vmem:[#allocation3 + $0x120] sm:$0xff]
    %v219 = vld [vmem:[#allocation3 + $0x128] sm:$0xff]
    %v220 = vld [vmem:[#allocation3 + $0x130] sm:$0xff]
    %v221 = vld [vmem:[#allocation3 + $0x138] sm:$0xff]
    %v222 = vld [vmem:[#allocation3 + $0x140] sm:$0xff]
    %v223 = vld [vmem:[#allocation3 + $0x148] sm:$0xff]
    %v224 = vld [vmem:[#allocation3 + $0x150] sm:$0xff]
    %v225 = vld [vmem:[#allocation3 + $0x158] sm:$0xff]
    %v226 = vld [vmem:[#allocation3 + $0x160] sm:$0xff]
    %v227 = vld [vmem:[#allocation3 + $0x168] sm:$0xff]
    %v228 = vld [vmem:[#allocation3 + $0x170] sm:$0xff]
    %v229 = vld [vmem:[#allocation3 + $0x178] sm:$0xff]
    %v230 = vld [vmem:[#allocation3 + $0x180] sm:$0xff]
    %v231 = vld [vmem:[#allocation3 + $0x188] sm:$0xff]
    %v232 = vld [vmem:[#allocation3 + $0x190] sm:$0xff]
    %v233 = vld [vmem:[#allocation3 + $0x198] sm:$0xff]
    %v234 = vld [vmem:[#allocation3 + $0x1a0] sm:$0xff]
    %v235 = vld [vmem:[#allocation3 + $0x1a8] sm:$0xff]
    %v236 = vld [vmem:[#allocation3 + $0x1b0] sm:$0xff]
    %v237 = vld [vmem:[#allocation3 + $0x1b8] sm:$0xff]
    %v238 = vld [vmem:[#allocation3 + $0x1c0] sm:$0xff]
    %v239 = vld [vmem:[#allocation3 + $0x1c8] sm:$0xff]
    %v240 = vld [vmem:[#allocation3 + $0x1d0] sm:$0xff]
    %v241 = vld [vmem:[#allocation3 + $0x1d8] sm:$0xff]
    %v242 = vld [vmem:[#allocation3 + $0x1e0] sm:$0xff]
    %v243 = vld [vmem:[#allocation3 + $0x1e8] sm:$0xff]
    %v244 = vld [vmem:[#allocation3 + $0x1f0] sm:$0xff]
    %v245 = vld [vmem:[#allocation3 + $0x1f8] sm:$0xff]
    %v246 = vld [vmem:[#allocation6] sm:$0xff]
    %v247 = vld [vmem:[#allocation6 + $0x8] sm:$0xff]
    %v248 = vld [vmem:[#allocation6 + $0x10] sm:$0xff]
    %v249 = vld [vmem:[#allocation6 + $0x18] sm:$0xff]
    %v250 = vld [vmem:[#allocation6 + $0x20] sm:$0xff]
    %v251 = vld [vmem:[#allocation6 + $0x28] sm:$0xff]
    %v252 = vld [vmem:[#allocation6 + $0x30] sm:$0xff]
    %v253 = vld [vmem:[#allocation6 + $0x38] sm:$0xff]
    %v254 = vld [vmem:[#allocation6 + $0x40] sm:$0xff]
    %v255 = vld [vmem:[#allocation6 + $0x48] sm:$0xff]
    %v256 = vld [vmem:[#allocation6 + $0x50] sm:$0xff]
    %v257 = vld [vmem:[#allocation6 + $0x58] sm:$0xff]
    %v258 = vld [vmem:[#allocation6 + $0x60] sm:$0xff]
    %v259 = vld [vmem:[#allocation6 + $0x68] sm:$0xff]
    %v260 = vld [vmem:[#allocation6 + $0x70] sm:$0xff]
    %v261 = vld [vmem:[#allocation6 + $0x78] sm:$0xff]
    %262 = vmatprep.subr.mxu0 0.0
    %263 = vmatpush1.msra.mxu0 %v246
    %264 = vmatprep.subr.mxu0 0.0
    %265 = vmatpush1.msra.mxu0 %v247
    %266 = vmatprep.subr.mxu0 0.0
    %267 = vmatpush1.msra.mxu0 %v248
    %268 = vmatprep.subr.mxu0 0.0
    %269 = vmatpush1.msra.mxu0 %v249
    %270 = vmatprep.subr.mxu0 0.0
    %271 = vmatpush1.msra.mxu0 %v250
    %272 = vmatprep.subr.mxu0 0.0
    %273 = vmatpush1.msra.mxu0 %v251
    %274 = vmatprep.subr.mxu0 0.0
    %275 = vmatpush1.msra.mxu0 %v252
    %276 = vmatprep.subr.mxu0 0.0
    %277 = vmatpush1.msra.mxu0 %v253
    %278 = vmatprep.subr.mxu0 0.0
    %279 = vmatpush1.msra.mxu0 %v254
    %280 = vmatprep.subr.mxu0 0.0
    %281 = vmatpush1.msra.mxu0 %v255
    %282 = vmatprep.subr.mxu0 0.0
    %283 = vmatpush1.msra.mxu0 %v256
    %284 = vmatprep.subr.mxu0 0.0
    %285 = vmatpush1.msra.mxu0 %v257
    %286 = vmatprep.subr.mxu0 0.0
    %287 = vmatpush1.msra.mxu0 %v258
    %288 = vmatprep.subr.mxu0 0.0
    %289 = vmatpush1.msra.mxu0 %v259
    %290 = vmatprep.subr.mxu0 0.0
    %291 = vmatpush1.msra.mxu0 %v260
    %292 = vmatprep.subr.mxu0 0.0
    %293 = vmatpush1.msra.mxu0 %v261
    %294 = vmatprep.subr.mxu0 0.0
    %295 = vmatpush1.msra.mxu0 0.0
    %296 = vmatprep.subr.mxu0 0.0
    %297 = vmatpush1.msra.mxu0 0.0
    %298 = vmatprep.subr.mxu0 0.0
    %299 = vmatpush1.msra.mxu0 0.0
    %300 = vmatprep.subr.mxu0 0.0
    %301 = vmatpush1.msra.mxu0 0.0
    %302 = vmatprep.subr.mxu0 0.0
    %303 = vmatpush1.msra.mxu0 0.0
    %304 = vmatprep.subr.mxu0 0.0
    %305 = vmatpush1.msra.mxu0 0.0
    %306 = vmatprep.subr.mxu0 0.0
    %307 = vmatpush1.msra.mxu0 0.0
    %308 = vmatprep.subr.mxu0 0.0
    %309 = vmatpush1.msra.mxu0 0.0
    %310 = vmatprep.subr.mxu0 0.0
    %311 = vmatpush1.msra.mxu0 0.0
    %312 = vmatprep.subr.mxu0 0.0
    %313 = vmatpush1.msra.mxu0 0.0
    %314 = vmatprep.subr.mxu0 0.0
    %315 = vmatpush1.msra.mxu0 0.0
    %316 = vmatprep.subr.mxu0 0.0
    %317 = vmatpush1.msra.mxu0 0.0
    %318 = vmatprep.subr.mxu0 0.0
    %319 = vmatpush1.msra.mxu0 0.0
    %320 = vmatprep.subr.mxu0 0.0
    %321 = vmatpush1.msra.mxu0 0.0
    %322 = vmatprep.subr.mxu0 0.0
    %323 = vmatpush1.msra.mxu0 0.0
    %324 = vmatprep.subr.mxu0 0.0
    %325 = vmatpush1.msra.mxu0 0.0
    %326 = vmatprep.mubr.f32.mxu0 0.0
    %327 = vmatmul.mubr.f32.gmra.mrb[0].mxu0 %v182
    %v328 = vpop.f32.mrb[0].mxu0
    %v329 = vadd.f32 0.0, %v328
    %v330 = vpop.f32.mrb[0].mxu0
    %331 = vmatprep.mubr.f32.mxu0 0.0
    %332 = vmatmul.mubr.f32.gmra.mrb[0].mxu0 %v183
    %v333 = vpop.f32.mrb[0].mxu0
    %v334 = vadd.f32 0.0, %v333
    %v335 = vpop.f32.mrb[0].mxu0
    %336 = vmatprep.mubr.f32.mxu0 0.0
    %337 = vmatmul.mubr.f32.gmra.mrb[0].mxu0 %v184
    %v338 = vpop.f32.mrb[0].mxu0
    %v339 = vadd.f32 0.0, %v338
    %v340 = vpop.f32.mrb[0].mxu0
    %341 = vmatprep.mubr.f32.mxu0 0.0
    %342 = vmatmul.mubr.f32.gmra.mrb[0].mxu0 %v185
    %v343 = vpop.f32.mrb[0].mxu0
    %v344 = vadd.f32 0.0, %v343
    %v345 = vpop.f32.mrb[0].mxu0
    %346 = vmatprep.mubr.f32.mxu0 0.0
    %347 = vmatmul.mubr.f32.gmra.mrb[0].mxu0 %v186
    %v348 = vpop.f32.mrb[0].mxu0
    %v349 = vadd.f32 0.0, %v348
    %v350 = vpop.f32.mrb[0].mxu0
    %351 = vmatprep.mubr.f32.mxu0 0.0
    %352 = vmatmul.mubr.f32.gmra.mrb[0].mxu0 %v187
    %v353 = vpop.f32.mrb[0].mxu0
    %v354 = vadd.f32 0.0, %v353
    %v355 = vpop.f32.mrb[0].mxu0
    %356 = vmatprep.mubr.f32.mxu0 0.0
    %357 = vmatmul.mubr.f32.gmra.mrb[0].mxu0 %v188
    %v358 = vpop.f32.mrb[0].mxu0
    %v359 = vadd.f32 0.0, %v358
    %v360 = vpop.f32.mrb[0].mxu0
    %361 = vmatprep.mubr.f32.mxu0 0.0
    %362 = vmatmul.mubr.f32.gmra.mrb[0].mxu0 %v189
    %v363 = vpop.f32.mrb[0].mxu0
    %v364 = vadd.f32 0.0, %v363
    %v365 = vpop.f32.mrb[0].mxu0
    %366 = vmatprep.mubr.f32.mxu0 0.0
    %367 = vmatmul.mubr.f32.gmra.mrb[0].mxu0 %v190
    %v368 = vpop.f32.mrb[0].mxu0
    %v369 = vadd.f32 0.0, %v368
    %v370 = vpop.f32.mrb[0].mxu0
    %371 = vmatprep.mubr.f32.mxu0 0.0
    %372 = vmatmul.mubr.f32.gmra.mrb[0].mxu0 %v191
    %v373 = vpop.f32.mrb[0].mxu0
    %v374 = vadd.f32 0.0, %v373
    %v375 = vpop.f32.mrb[0].mxu0
    %376 = vmatprep.mubr.f32.mxu0 0.0
    %377 = vmatmul.mubr.f32.gmra.mrb[0].mxu0 %v192
    %v378 = vpop.f32.mrb[0].mxu0
    %v379 = vadd.f32 0.0, %v378
    %v380 = vpop.f32.mrb[0].mxu0
    %381 = vmatprep.mubr.f32.mxu0 0.0
    %382 = vmatmul.mubr.f32.gmra.mrb[0].mxu0 %v193
    %v383 = vpop.f32.mrb[0].mxu0
    %v384 = vadd.f32 0.0, %v383
    %v385 = vpop.f32.mrb[0].mxu0
    %386 = vmatprep.mubr.f32.mxu0 0.0
    %387 = vmatmul.mubr.f32.gmra.mrb[0].mxu0 %v194
    %v388 = vpop.f32.mrb[0].mxu0
    %v389 = vadd.f32 0.0, %v388
    %v390 = vpop.f32.mrb[0].mxu0
    %391 = vmatprep.mubr.f32.mxu0 0.0
    %392 = vmatmul.mubr.f32.gmra.mrb[0].mxu0 %v195
    %v393 = vpop.f32.mrb[0].mxu0
    %v394 = vadd.f32 0.0, %v393
    %v395 = vpop.f32.mrb[0].mxu0
    %396 = vmatprep.mubr.f32.mxu0 0.0
    %397 = vmatmul.mubr.f32.gmra.mrb[0].mxu0 %v196
    %v398 = vpop.f32.mrb[0].mxu0
    %v399 = vadd.f32 0.0, %v398
    %v400 = vpop.f32.mrb[0].mxu0
    %401 = vmatprep.mubr.f32.mxu0 0.0
    %402 = vmatmul.mubr.f32.gmra.mrb[0].mxu0 %v197
    %v403 = vpop.f32.mrb[0].mxu0
    %v404 = vadd.f32 0.0, %v403
    %v405 = vpop.f32.mrb[0].mxu0
    %406 = vmatprep.mubr.f32.mxu0 0.0
    %407 = vmatmul.mubr.f32.gmra.mrb[0].mxu0 %v198
    %v408 = vpop.f32.mrb[0].mxu0
    %v409 = vadd.f32 0.0, %v408
    %v410 = vpop.f32.mrb[0].mxu0
    %411 = vmatprep.mubr.f32.mxu0 0.0
    %412 = vmatmul.mubr.f32.gmra.mrb[0].mxu0 %v199
    %v413 = vpop.f32.mrb[0].mxu0
    %v414 = vadd.f32 0.0, %v413
    %v415 = vpop.f32.mrb[0].mxu0
    %416 = vmatprep.mubr.f32.mxu0 0.0
    %417 = vmatmul.mubr.f32.gmra.mrb[0].mxu0 %v200
    %v418 = vpop.f32.mrb[0].mxu0
    %v419 = vadd.f32 0.0, %v418
    %v420 = vpop.f32.mrb[0].mxu0
    %421 = vmatprep.mubr.f32.mxu0 0.0
    %422 = vmatmul.mubr.f32.gmra.mrb[0].mxu0 %v201
    %v423 = vpop.f32.mrb[0].mxu0
    %v424 = vadd.f32 0.0, %v423
    %v425 = vpop.f32.mrb[0].mxu0
    %426 = vmatprep.mubr.f32.mxu0 0.0
    %427 = vmatmul.mubr.f32.gmra.mrb[0].mxu0 %v202
    %v428 = vpop.f32.mrb[0].mxu0
    %v429 = vadd.f32 0.0, %v428
    %v430 = vpop.f32.mrb[0].mxu0
    %431 = vmatprep.mubr.f32.mxu0 0.0
    %432 = vmatmul.mubr.f32.gmra.mrb[0].mxu0 %v203
    %v433 = vpop.f32.mrb[0].mxu0
    %v434 = vadd.f32 0.0, %v433
    %v435 = vpop.f32.mrb[0].mxu0
    %436 = vmatprep.mubr.f32.mxu0 0.0
    %437 = vmatmul.mubr.f32.gmra.mrb[0].mxu0 %v204
    %v438 = vpop.f32.mrb[0].mxu0
    %v439 = vadd.f32 0.0, %v438
    %v440 = vpop.f32.mrb[0].mxu0
    %441 = vmatprep.mubr.f32.mxu0 0.0
    %442 = vmatmul.mubr.f32.gmra.mrb[0].mxu0 %v205
    %v443 = vpop.f32.mrb[0].mxu0
    %v444 = vadd.f32 0.0, %v443
    %v445 = vpop.f32.mrb[0].mxu0
    %446 = vmatprep.mubr.f32.mxu0 0.0
    %447 = vmatmul.mubr.f32.gmra.mrb[0].mxu0 %v206
    %v448 = vpop.f32.mrb[0].mxu0
    %v449 = vadd.f32 0.0, %v448
    %v450 = vpop.f32.mrb[0].mxu0
    %451 = vmatprep.mubr.f32.mxu0 0.0
    %452 = vmatmul.mubr.f32.gmra.mrb[0].mxu0 %v207
    %v453 = vpop.f32.mrb[0].mxu0
    %v454 = vadd.f32 0.0, %v453
    %v455 = vpop.f32.mrb[0].mxu0
    %456 = vmatprep.mubr.f32.mxu0 0.0
    %457 = vmatmul.mubr.f32.gmra.mrb[0].mxu0 %v208
    %v458 = vpop.f32.mrb[0].mxu0
    %v459 = vadd.f32 0.0, %v458
    %v460 = vpop.f32.mrb[0].mxu0
    %461 = vmatprep.mubr.f32.mxu0 0.0
    %462 = vmatmul.mubr.f32.gmra.mrb[0].mxu0 %v209
    %v463 = vpop.f32.mrb[0].mxu0
    %v464 = vadd.f32 0.0, %v463
    %v465 = vpop.f32.mrb[0].mxu0
    %466 = vmatprep.mubr.f32.mxu0 0.0
    %467 = vmatmul.mubr.f32.gmra.mrb[0].mxu0 %v210
    %v468 = vpop.f32.mrb[0].mxu0
    %v469 = vadd.f32 0.0, %v468
    %v470 = vpop.f32.mrb[0].mxu0
    %471 = vmatprep.mubr.f32.mxu0 0.0
    %472 = vmatmul.mubr.f32.gmra.mrb[0].mxu0 %v211
    %v473 = vpop.f32.mrb[0].mxu0
    %v474 = vadd.f32 0.0, %v473
    %v475 = vpop.f32.mrb[0].mxu0
    %476 = vmatprep.mubr.f32.mxu0 0.0
    %477 = vmatmul.mubr.f32.gmra.mrb[0].mxu0 %v212
    %v478 = vpop.f32.mrb[0].mxu0
    %v479 = vadd.f32 0.0, %v478
    %v480 = vpop.f32.mrb[0].mxu0
    %481 = vmatprep.mubr.f32.mxu0 0.0
    %482 = vmatmul.mubr.f32.gmra.mrb[0].mxu0 %v213
    %v483 = vpop.f32.mrb[0].mxu0
    %v484 = vadd.f32 0.0, %v483
    %v485 = vpop.f32.mrb[0].mxu0
    %486 = vmatprep.mubr.f32.mxu0 0.0
    %487 = vmatmul.mubr.f32.gmra.mrb[0].mxu0 %v214
    %v488 = vpop.f32.mrb[0].mxu0
    %v489 = vadd.f32 0.0, %v488
    %v490 = vpop.f32.mrb[0].mxu0
    %491 = vmatprep.mubr.f32.mxu0 0.0
    %492 = vmatmul.mubr.f32.gmra.mrb[0].mxu0 %v215
    %v493 = vpop.f32.mrb[0].mxu0
    %v494 = vadd.f32 0.0, %v493
    %v495 = vpop.f32.mrb[0].mxu0
    %496 = vmatprep.mubr.f32.mxu0 0.0
    %497 = vmatmul.mubr.f32.gmra.mrb[0].mxu0 %v216
    %v498 = vpop.f32.mrb[0].mxu0
    %v499 = vadd.f32 0.0, %v498
    %v500 = vpop.f32.mrb[0].mxu0
    %501 = vmatprep.mubr.f32.mxu0 0.0
    %502 = vmatmul.mubr.f32.gmra.mrb[0].mxu0 %v217
    %v503 = vpop.f32.mrb[0].mxu0
    %v504 = vadd.f32 0.0, %v503
    %v505 = vpop.f32.mrb[0].mxu0
    %506 = vmatprep.mubr.f32.mxu0 0.0
    %507 = vmatmul.mubr.f32.gmra.mrb[0].mxu0 %v218
    %v508 = vpop.f32.mrb[0].mxu0
    %v509 = vadd.f32 0.0, %v508
    %v510 = vpop.f32.mrb[0].mxu0
    %511 = vmatprep.mubr.f32.mxu0 0.0
    %512 = vmatmul.mubr.f32.gmra.mrb[0].mxu0 %v219
    %v513 = vpop.f32.mrb[0].mxu0
    %v514 = vadd.f32 0.0, %v513
    %v515 = vpop.f32.mrb[0].mxu0
    %516 = vmatprep.mubr.f32.mxu0 0.0
    %517 = vmatmul.mubr.f32.gmra.mrb[0].mxu0 %v220
    %v518 = vpop.f32.mrb[0].mxu0
    %v519 = vadd.f32 0.0, %v518
    %v520 = vpop.f32.mrb[0].mxu0
    %521 = vmatprep.mubr.f32.mxu0 0.0
    %522 = vmatmul.mubr.f32.gmra.mrb[0].mxu0 %v221
    %v523 = vpop.f32.mrb[0].mxu0
    %v524 = vadd.f32 0.0, %v523
    %v525 = vpop.f32.mrb[0].mxu0
    %526 = vmatprep.mubr.f32.mxu0 0.0
    %527 = vmatmul.mubr.f32.gmra.mrb[0].mxu0 %v222
    %v528 = vpop.f32.mrb[0].mxu0
    %v529 = vadd.f32 0.0, %v528
    %v530 = vpop.f32.mrb[0].mxu0
    %531 = vmatprep.mubr.f32.mxu0 0.0
    %532 = vmatmul.mubr.f32.gmra.mrb[0].mxu0 %v223
    %v533 = vpop.f32.mrb[0].mxu0
    %v534 = vadd.f32 0.0, %v533
    %v535 = vpop.f32.mrb[0].mxu0
    %536 = vmatprep.mubr.f32.mxu0 0.0
    %537 = vmatmul.mubr.f32.gmra.mrb[0].mxu0 %v224
    %v538 = vpop.f32.mrb[0].mxu0
    %v539 = vadd.f32 0.0, %v538
    %v540 = vpop.f32.mrb[0].mxu0
    %541 = vmatprep.mubr.f32.mxu0 0.0
    %542 = vmatmul.mubr.f32.gmra.mrb[0].mxu0 %v225
    %v543 = vpop.f32.mrb[0].mxu0
    %v544 = vadd.f32 0.0, %v543
    %v545 = vpop.f32.mrb[0].mxu0
    %546 = vmatprep.mubr.f32.mxu0 0.0
    %547 = vmatmul.mubr.f32.gmra.mrb[0].mxu0 %v226
    %v548 = vpop.f32.mrb[0].mxu0
    %v549 = vadd.f32 0.0, %v548
    %v550 = vpop.f32.mrb[0].mxu0
    %551 = vmatprep.mubr.f32.mxu0 0.0
    %552 = vmatmul.mubr.f32.gmra.mrb[0].mxu0 %v227
    %v553 = vpop.f32.mrb[0].mxu0
    %v554 = vadd.f32 0.0, %v553
    %v555 = vpop.f32.mrb[0].mxu0
    %556 = vmatprep.mubr.f32.mxu0 0.0
    %557 = vmatmul.mubr.f32.gmra.mrb[0].mxu0 %v228
    %v558 = vpop.f32.mrb[0].mxu0
    %v559 = vadd.f32 0.0, %v558
    %v560 = vpop.f32.mrb[0].mxu0
    %561 = vmatprep.mubr.f32.mxu0 0.0
    %562 = vmatmul.mubr.f32.gmra.mrb[0].mxu0 %v229
    %v563 = vpop.f32.mrb[0].mxu0
    %v564 = vadd.f32 0.0, %v563
    %v565 = vpop.f32.mrb[0].mxu0
    %566 = vmatprep.mubr.f32.mxu0 0.0
    %567 = vmatmul.mubr.f32.gmra.mrb[0].mxu0 %v230
    %v568 = vpop.f32.mrb[0].mxu0
    %v569 = vadd.f32 0.0, %v568
    %v570 = vpop.f32.mrb[0].mxu0
    %571 = vmatprep.mubr.f32.mxu0 0.0
    %572 = vmatmul.mubr.f32.gmra.mrb[0].mxu0 %v231
    %v573 = vpop.f32.mrb[0].mxu0
    %v574 = vadd.f32 0.0, %v573
    %v575 = vpop.f32.mrb[0].mxu0
    %576 = vmatprep.mubr.f32.mxu0 0.0
    %577 = vmatmul.mubr.f32.gmra.mrb[0].mxu0 %v232
    %v578 = vpop.f32.mrb[0].mxu0
    %v579 = vadd.f32 0.0, %v578
    %v580 = vpop.f32.mrb[0].mxu0
    %581 = vmatprep.mubr.f32.mxu0 0.0
    %582 = vmatmul.mubr.f32.gmra.mrb[0].mxu0 %v233
    %v583 = vpop.f32.mrb[0].mxu0
    %v584 = vadd.f32 0.0, %v583
    %v585 = vpop.f32.mrb[0].mxu0
    %586 = vmatprep.mubr.f32.mxu0 0.0
    %587 = vmatmul.mubr.f32.gmra.mrb[0].mxu0 %v234
    %v588 = vpop.f32.mrb[0].mxu0
    %v589 = vadd.f32 0.0, %v588
    %v590 = vpop.f32.mrb[0].mxu0
    %591 = vmatprep.mubr.f32.mxu0 0.0
    %592 = vmatmul.mubr.f32.gmra.mrb[0].mxu0 %v235
    %v593 = vpop.f32.mrb[0].mxu0
    %v594 = vadd.f32 0.0, %v593
    %v595 = vpop.f32.mrb[0].mxu0
    %596 = vmatprep.mubr.f32.mxu0 0.0
    %597 = vmatmul.mubr.f32.gmra.mrb[0].mxu0 %v236
    %v598 = vpop.f32.mrb[0].mxu0
    %v599 = vadd.f32 0.0, %v598
    %v600 = vpop.f32.mrb[0].mxu0
    %601 = vmatprep.mubr.f32.mxu0 0.0
    %602 = vmatmul.mubr.f32.gmra.mrb[0].mxu0 %v237
    %v603 = vpop.f32.mrb[0].mxu0
    %v604 = vadd.f32 0.0, %v603
    %v605 = vpop.f32.mrb[0].mxu0
    %606 = vmatprep.mubr.f32.mxu0 0.0
    %607 = vmatmul.mubr.f32.gmra.mrb[0].mxu0 %v238
    %v608 = vpop.f32.mrb[0].mxu0
    %v609 = vadd.f32 0.0, %v608
    %v610 = vpop.f32.mrb[0].mxu0
    %611 = vmatprep.mubr.f32.mxu0 0.0
    %612 = vmatmul.mubr.f32.gmra.mrb[0].mxu0 %v239
    %v613 = vpop.f32.mrb[0].mxu0
    %v614 = vadd.f32 0.0, %v613
    %v615 = vpop.f32.mrb[0].mxu0
    %616 = vmatprep.mubr.f32.mxu0 0.0
    %617 = vmatmul.mubr.f32.gmra.mrb[0].mxu0 %v240
    %v618 = vpop.f32.mrb[0].mxu0
    %v619 = vadd.f32 0.0, %v618
    %v620 = vpop.f32.mrb[0].mxu0
    %621 = vmatprep.mubr.f32.mxu0 0.0
    %622 = vmatmul.mubr.f32.gmra.mrb[0].mxu0 %v241
    %v623 = vpop.f32.mrb[0].mxu0
    %v624 = vadd.f32 0.0, %v623
    %v625 = vpop.f32.mrb[0].mxu0
    %626 = vmatprep.mubr.f32.mxu0 0.0
    %627 = vmatmul.mubr.f32.gmra.mrb[0].mxu0 %v242
    %v628 = vpop.f32.mrb[0].mxu0
    %v629 = vadd.f32 0.0, %v628
    %v630 = vpop.f32.mrb[0].mxu0
    %631 = vmatprep.mubr.f32.mxu0 0.0
    %632 = vmatmul.mubr.f32.gmra.mrb[0].mxu0 %v243
    %v633 = vpop.f32.mrb[0].mxu0
    %v634 = vadd.f32 0.0, %v633
    %v635 = vpop.f32.mrb[0].mxu0
    %636 = vmatprep.mubr.f32.mxu0 0.0
    %637 = vmatmul.mubr.f32.gmra.mrb[0].mxu0 %v244
    %v638 = vpop.f32.mrb[0].mxu0
    %v639 = vadd.f32 0.0, %v638
    %v640 = vpop.f32.mrb[0].mxu0
    %641 = vmatprep.mubr.f32.mxu0 0.0
    %642 = vmatmul.mubr.f32.gmra.mrb[0].mxu0 %v245
    %v643 = vpop.f32.mrb[0].mxu0
    %v644 = vadd.f32 0.0, %v643
    %v645 = vpop.f32.mrb[0].mxu0
    %646 = vdwg.mxu0
    %v647 = vadd.f32 %v118, %v329
    %v648 = vadd.f32 %v119, %v334
    %v649 = vadd.f32 %v120, %v339
    %v650 = vadd.f32 %v121, %v344
    %v651 = vadd.f32 %v122, %v349
    %v652 = vadd.f32 %v123, %v354
    %v653 = vadd.f32 %v124, %v359
    %v654 = vadd.f32 %v125, %v364
    %v655 = vadd.f32 %v126, %v369
    %v656 = vadd.f32 %v127, %v374
    %v657 = vadd.f32 %v128, %v379
    %v658 = vadd.f32 %v129, %v384
    %v659 = vadd.f32 %v130, %v389
    %v660 = vadd.f32 %v131, %v394
    %v661 = vadd.f32 %v132, %v399
    %v662 = vadd.f32 %v133, %v404
    %v663 = vadd.f32 %v134, %v409
    %v664 = vadd.f32 %v135, %v414
    %v665 = vadd.f32 %v136, %v419
    %v666 = vadd.f32 %v137, %v424
    %v667 = vadd.f32 %v138, %v429
    %v668 = vadd.f32 %v139, %v434
    %v669 = vadd.f32 %v140, %v439
    %v670 = vadd.f32 %v141, %v444
    %v671 = vadd.f32 %v142, %v449
    %v672 = vadd.f32 %v143, %v454
    %v673 = vadd.f32 %v144, %v459
    %v674 = vadd.f32 %v145, %v464
    %v675 = vadd.f32 %v146, %v469
    %v676 = vadd.f32 %v147, %v474
    %v677 = vadd.f32 %v148, %v479
    %v678 = vadd.f32 %v149, %v484
    %v679 = vadd.f32 %v150, %v489
    %v680 = vadd.f32 %v151, %v494
    %v681 = vadd.f32 %v152, %v499
    %v682 = vadd.f32 %v153, %v504
    %v683 = vadd.f32 %v154, %v509
    %v684 = vadd.f32 %v155, %v514
    %v685 = vadd.f32 %v156, %v519
    %v686 = vadd.f32 %v157, %v524
    %v687 = vadd.f32 %v158, %v529
    %v688 = vadd.f32 %v159, %v534
    %v689 = vadd.f32 %v160, %v539
    %v690 = vadd.f32 %v161, %v544
    %v691 = vadd.f32 %v162, %v549
    %v692 = vadd.f32 %v163, %v554
    %v693 = vadd.f32 %v164, %v559
    %v694 = vadd.f32 %v165, %v564
    %v695 = vadd.f32 %v166, %v569
    %v696 = vadd.f32 %v167, %v574
    %v697 = vadd.f32 %v168, %v579
    %v698 = vadd.f32 %v169, %v584
    %v699 = vadd.f32 %v170, %v589
    %v700 = vadd.f32 %v171, %v594
    %v701 = vadd.f32 %v172, %v599
    %v702 = vadd.f32 %v173, %v604
    %v703 = vadd.f32 %v174, %v609
    %v704 = vadd.f32 %v175, %v614
    %v705 = vadd.f32 %v176, %v619
    %v706 = vadd.f32 %v177, %v624
    %v707 = vadd.f32 %v178, %v629
    %v708 = vadd.f32 %v179, %v634
    %v709 = vadd.f32 %v180, %v639
    %v710 = vadd.f32 %v181, %v644
    %711 = vst [vmem:[#allocation2] sm:$0xff] %v647
    %712 = vst [vmem:[#allocation2 + $0x8] sm:$0xff] %v648
    %713 = vst [vmem:[#allocation2 + $0x10] sm:$0xff] %v649
    %714 = vst [vmem:[#allocation2 + $0x18] sm:$0xff] %v650
    %715 = vst [vmem:[#allocation2 + $0x20] sm:$0xff] %v651
    %716 = vst [vmem:[#allocation2 + $0x28] sm:$0xff] %v652
    %717 = vst [vmem:[#allocation2 + $0x30] sm:$0xff] %v653
    %718 = vst [vmem:[#allocation2 + $0x38] sm:$0xff] %v654
    %719 = vst [vmem:[#allocation2 + $0x40] sm:$0xff] %v655
    %720 = vst [vmem:[#allocation2 + $0x48] sm:$0xff] %v656
    %721 = vst [vmem:[#allocation2 + $0x50] sm:$0xff] %v657
    %722 = vst [vmem:[#allocation2 + $0x58] sm:$0xff] %v658
    %723 = vst [vmem:[#allocation2 + $0x60] sm:$0xff] %v659
    %724 = vst [vmem:[#allocation2 + $0x68] sm:$0xff] %v660
    %725 = vst [vmem:[#allocation2 + $0x70] sm:$0xff] %v661
    %726 = vst [vmem:[#allocation2 + $0x78] sm:$0xff] %v662
    %727 = vst [vmem:[#allocation2 + $0x80] sm:$0xff] %v663
    %728 = vst [vmem:[#allocation2 + $0x88] sm:$0xff] %v664
    %729 = vst [vmem:[#allocation2 + $0x90] sm:$0xff] %v665
    %730 = vst [vmem:[#allocation2 + $0x98] sm:$0xff] %v666
    %731 = vst [vmem:[#allocation2 + $0xa0] sm:$0xff] %v667
    %732 = vst [vmem:[#allocation2 + $0xa8] sm:$0xff] %v668
    %733 = vst [vmem:[#allocation2 + $0xb0] sm:$0xff] %v669
    %734 = vst [vmem:[#allocation2 + $0xb8] sm:$0xff] %v670
    %735 = vst [vmem:[#allocation2 + $0xc0] sm:$0xff] %v671
    %736 = vst [vmem:[#allocation2 + $0xc8] sm:$0xff] %v672
    %737 = vst [vmem:[#allocation2 + $0xd0] sm:$0xff] %v673
    %738 = vst [vmem:[#allocation2 + $0xd8] sm:$0xff] %v674
    %739 = vst [vmem:[#allocation2 + $0xe0] sm:$0xff] %v675
    %740 = vst [vmem:[#allocation2 + $0xe8] sm:$0xff] %v676
    %741 = vst [vmem:[#allocation2 + $0xf0] sm:$0xff] %v677
    %742 = vst [vmem:[#allocation2 + $0xf8] sm:$0xff] %v678
    %743 = vst [vmem:[#allocation2 + $0x100] sm:$0xff] %v679
    %744 = vst [vmem:[#allocation2 + $0x108] sm:$0xff] %v680
    %745 = vst [vmem:[#allocation2 + $0x110] sm:$0xff] %v681
    %746 = vst [vmem:[#allocation2 + $0x118] sm:$0xff] %v682
    %747 = vst [vmem:[#allocation2 + $0x120] sm:$0xff] %v683
    %748 = vst [vmem:[#allocation2 + $0x128] sm:$0xff] %v684
    %749 = vst [vmem:[#allocation2 + $0x130] sm:$0xff] %v685
    %750 = vst [vmem:[#allocation2 + $0x138] sm:$0xff] %v686
    %751 = vst [vmem:[#allocation2 + $0x140] sm:$0xff] %v687
    %752 = vst [vmem:[#allocation2 + $0x148] sm:$0xff] %v688
    %753 = vst [vmem:[#allocation2 + $0x150] sm:$0xff] %v689
    %754 = vst [vmem:[#allocation2 + $0x158] sm:$0xff] %v690
    %755 = vst [vmem:[#allocation2 + $0x160] sm:$0xff] %v691
    %756 = vst [vmem:[#allocation2 + $0x168] sm:$0xff] %v692
    %757 = vst [vmem:[#allocation2 + $0x170] sm:$0xff] %v693
    %758 = vst [vmem:[#allocation2 + $0x178] sm:$0xff] %v694
    %759 = vst [vmem:[#allocation2 + $0x180] sm:$0xff] %v695
    %760 = vst [vmem:[#allocation2 + $0x188] sm:$0xff] %v696
    %761 = vst [vmem:[#allocation2 + $0x190] sm:$0xff] %v697
    %762 = vst [vmem:[#allocation2 + $0x198] sm:$0xff] %v698
    %763 = vst [vmem:[#allocation2 + $0x1a0] sm:$0xff] %v699
    %764 = vst [vmem:[#allocation2 + $0x1a8] sm:$0xff] %v700
    %765 = vst [vmem:[#allocation2 + $0x1b0] sm:$0xff] %v701
    %766 = vst [vmem:[#allocation2 + $0x1b8] sm:$0xff] %v702
    %767 = vst [vmem:[#allocation2 + $0x1c0] sm:$0xff] %v703
    %768 = vst [vmem:[#allocation2 + $0x1c8] sm:$0xff] %v704
    %769 = vst [vmem:[#allocation2 + $0x1d0] sm:$0xff] %v705
    %770 = vst [vmem:[#allocation2 + $0x1d8] sm:$0xff] %v706
    %771 = vst [vmem:[#allocation2 + $0x1e0] sm:$0xff] %v707
    %772 = vst [vmem:[#allocation2 + $0x1e8] sm:$0xff] %v708
    %773 = vst [vmem:[#allocation2 + $0x1f0] sm:$0xff] %v709
    %774 = vst [vmem:[#allocation2 + $0x1f8] sm:$0xff] %v710
    // Predicated region
    $region26: #{tpu_custom_call.1} parent=1 // pred_check
      %p775 = pneg %p43
    $region27: #{tpu_custom_call.1} parent=1 // pred_check_branch
      %777 = sbr.rel (%p775) target = $region29
    $region28: #{tpu_custom_call.1} parent=1 // pred_region
      %v778 = vld [vmem:[#allocation2] sm:$0xff]
      %v779 = vld [vmem:[#allocation2 + $0x8] sm:$0xff]
      %v780 = vld [vmem:[#allocation2 + $0x10] sm:$0xff]
      %v781 = vld [vmem:[#allocation2 + $0x18] sm:$0xff]
      %v782 = vld [vmem:[#allocation2 + $0x20] sm:$0xff]
      %v783 = vld [vmem:[#allocation2 + $0x28] sm:$0xff]
      %v784 = vld [vmem:[#allocation2 + $0x30] sm:$0xff]
      %v785 = vld [vmem:[#allocation2 + $0x38] sm:$0xff]
      %v786 = vld [vmem:[#allocation2 + $0x40] sm:$0xff]
      %v787 = vld [vmem:[#allocation2 + $0x48] sm:$0xff]
      %v788 = vld [vmem:[#allocation2 + $0x50] sm:$0xff]
      %v789 = vld [vmem:[#allocation2 + $0x58] sm:$0xff]
      %v790 = vld [vmem:[#allocation2 + $0x60] sm:$0xff]
      %v791 = vld [vmem:[#allocation2 + $0x68] sm:$0xff]
      %v792 = vld [vmem:[#allocation2 + $0x70] sm:$0xff]
      %v793 = vld [vmem:[#allocation2 + $0x78] sm:$0xff]
      %v794 = vld [vmem:[#allocation2 + $0x80] sm:$0xff]
      %v795 = vld [vmem:[#allocation2 + $0x88] sm:$0xff]
      %v796 = vld [vmem:[#allocation2 + $0x90] sm:$0xff]
      %v797 = vld [vmem:[#allocation2 + $0x98] sm:$0xff]
      %v798 = vld [vmem:[#allocation2 + $0xa0] sm:$0xff]
      %v799 = vld [vmem:[#allocation2 + $0xa8] sm:$0xff]
      %v800 = vld [vmem:[#allocation2 + $0xb0] sm:$0xff]
      %v801 = vld [vmem:[#allocation2 + $0xb8] sm:$0xff]
      %v802 = vld [vmem:[#allocation2 + $0xc0] sm:$0xff]
      %v803 = vld [vmem:[#allocation2 + $0xc8] sm:$0xff]
      %v804 = vld [vmem:[#allocation2 + $0xd0] sm:$0xff]
      %v805 = vld [vmem:[#allocation2 + $0xd8] sm:$0xff]
      %v806 = vld [vmem:[#allocation2 + $0xe0] sm:$0xff]
      %v807 = vld [vmem:[#allocation2 + $0xe8] sm:$0xff]
      %v808 = vld [vmem:[#allocation2 + $0xf0] sm:$0xff]
      %v809 = vld [vmem:[#allocation2 + $0xf8] sm:$0xff]
      %v810 = vld [vmem:[#allocation2 + $0x100] sm:$0xff]
      %v811 = vld [vmem:[#allocation2 + $0x108] sm:$0xff]
      %v812 = vld [vmem:[#allocation2 + $0x110] sm:$0xff]
      %v813 = vld [vmem:[#allocation2 + $0x118] sm:$0xff]
      %v814 = vld [vmem:[#allocation2 + $0x120] sm:$0xff]
      %v815 = vld [vmem:[#allocation2 + $0x128] sm:$0xff]
      %v816 = vld [vmem:[#allocation2 + $0x130] sm:$0xff]
      %v817 = vld [vmem:[#allocation2 + $0x138] sm:$0xff]
      %v818 = vld [vmem:[#allocation2 + $0x140] sm:$0xff]
      %v819 = vld [vmem:[#allocation2 + $0x148] sm:$0xff]
      %v820 = vld [vmem:[#allocation2 + $0x150] sm:$0xff]
      %v821 = vld [vmem:[#allocation2 + $0x158] sm:$0xff]
      %v822 = vld [vmem:[#allocation2 + $0x160] sm:$0xff]
      %v823 = vld [vmem:[#allocation2 + $0x168] sm:$0xff]
      %v824 = vld [vmem:[#allocation2 + $0x170] sm:$0xff]
      %v825 = vld [vmem:[#allocation2 + $0x178] sm:$0xff]
      %v826 = vld [vmem:[#allocation2 + $0x180] sm:$0xff]
      %v827 = vld [vmem:[#allocation2 + $0x188] sm:$0xff]
      %v828 = vld [vmem:[#allocation2 + $0x190] sm:$0xff]
      %v829 = vld [vmem:[#allocation2 + $0x198] sm:$0xff]
      %v830 = vld [vmem:[#allocation2 + $0x1a0] sm:$0xff]
      %v831 = vld [vmem:[#allocation2 + $0x1a8] sm:$0xff]
      %v832 = vld [vmem:[#allocation2 + $0x1b0] sm:$0xff]
      %v833 = vld [vmem:[#allocation2 + $0x1b8] sm:$0xff]
      %v834 = vld [vmem:[#allocation2 + $0x1c0] sm:$0xff]
      %v835 = vld [vmem:[#allocation2 + $0x1c8] sm:$0xff]
      %v836 = vld [vmem:[#allocation2 + $0x1d0] sm:$0xff]
      %v837 = vld [vmem:[#allocation2 + $0x1d8] sm:$0xff]
      %v838 = vld [vmem:[#allocation2 + $0x1e0] sm:$0xff]
      %v839 = vld [vmem:[#allocation2 + $0x1e8] sm:$0xff]
      %v840 = vld [vmem:[#allocation2 + $0x1f0] sm:$0xff]
      %v841 = vld [vmem:[#allocation2 + $0x1f8] sm:$0xff]
      %842 = vst [vmem:[#allocation8] sm:$0xff] %v778
      %843 = vst [vmem:[#allocation8 + $0x8] sm:$0xff] %v779
      %844 = vst [vmem:[#allocation8 + $0x10] sm:$0xff] %v780
      %845 = vst [vmem:[#allocation8 + $0x18] sm:$0xff] %v781
      %846 = vst [vmem:[#allocation8 + $0x20] sm:$0xff] %v782
      %847 = vst [vmem:[#allocation8 + $0x28] sm:$0xff] %v783
      %848 = vst [vmem:[#allocation8 + $0x30] sm:$0xff] %v784
      %849 = vst [vmem:[#allocation8 + $0x38] sm:$0xff] %v785
      %850 = vst [vmem:[#allocation8 + $0x40] sm:$0xff] %v786
      %851 = vst [vmem:[#allocation8 + $0x48] sm:$0xff] %v787
      %852 = vst [vmem:[#allocation8 + $0x50] sm:$0xff] %v788
      %853 = vst [vmem:[#allocation8 + $0x58] sm:$0xff] %v789
      %854 = vst [vmem:[#allocation8 + $0x60] sm:$0xff] %v790
      %855 = vst [vmem:[#allocation8 + $0x68] sm:$0xff] %v791
      %856 = vst [vmem:[#allocation8 + $0x70] sm:$0xff] %v792
      %857 = vst [vmem:[#allocation8 + $0x78] sm:$0xff] %v793
      %858 = vst [vmem:[#allocation8 + $0x80] sm:$0xff] %v794
      %859 = vst [vmem:[#allocation8 + $0x88] sm:$0xff] %v795
      %860 = vst [vmem:[#allocation8 + $0x90] sm:$0xff] %v796
      %861 = vst [vmem:[#allocation8 + $0x98] sm:$0xff] %v797
      %862 = vst [vmem:[#allocation8 + $0xa0] sm:$0xff] %v798
      %863 = vst [vmem:[#allocation8 + $0xa8] sm:$0xff] %v799
      %864 = vst [vmem:[#allocation8 + $0xb0] sm:$0xff] %v800
      %865 = vst [vmem:[#allocation8 + $0xb8] sm:$0xff] %v801
      %866 = vst [vmem:[#allocation8 + $0xc0] sm:$0xff] %v802
      %867 = vst [vmem:[#allocation8 + $0xc8] sm:$0xff] %v803
      %868 = vst [vmem:[#allocation8 + $0xd0] sm:$0xff] %v804
      %869 = vst [vmem:[#allocation8 + $0xd8] sm:$0xff] %v805
      %870 = vst [vmem:[#allocation8 + $0xe0] sm:$0xff] %v806
      %871 = vst [vmem:[#allocation8 + $0xe8] sm:$0xff] %v807
      %872 = vst [vmem:[#allocation8 + $0xf0] sm:$0xff] %v808
      %873 = vst [vmem:[#allocation8 + $0xf8] sm:$0xff] %v809
      %874 = vst [vmem:[#allocation8 + $0x100] sm:$0xff] %v810
      %875 = vst [vmem:[#allocation8 + $0x108] sm:$0xff] %v811
      %876 = vst [vmem:[#allocation8 + $0x110] sm:$0xff] %v812
      %877 = vst [vmem:[#allocation8 + $0x118] sm:$0xff] %v813
      %878 = vst [vmem:[#allocation8 + $0x120] sm:$0xff] %v814
      %879 = vst [vmem:[#allocation8 + $0x128] sm:$0xff] %v815
      %880 = vst [vmem:[#allocation8 + $0x130] sm:$0xff] %v816
      %881 = vst [vmem:[#allocation8 + $0x138] sm:$0xff] %v817
      %882 = vst [vmem:[#allocation8 + $0x140] sm:$0xff] %v818
      %883 = vst [vmem:[#allocation8 + $0x148] sm:$0xff] %v819
      %884 = vst [vmem:[#allocation8 + $0x150] sm:$0xff] %v820
      %885 = vst [vmem:[#allocation8 + $0x158] sm:$0xff] %v821
      %886 = vst [vmem:[#allocation8 + $0x160] sm:$0xff] %v822
      %887 = vst [vmem:[#allocation8 + $0x168] sm:$0xff] %v823
      %888 = vst [vmem:[#allocation8 + $0x170] sm:$0xff] %v824
      %889 = vst [vmem:[#allocation8 + $0x178] sm:$0xff] %v825
      %890 = vst [vmem:[#allocation8 + $0x180] sm:$0xff] %v826
      %891 = vst [vmem:[#allocation8 + $0x188] sm:$0xff] %v827
      %892 = vst [vmem:[#allocation8 + $0x190] sm:$0xff] %v828
      %893 = vst [vmem:[#allocation8 + $0x198] sm:$0xff] %v829
      %894 = vst [vmem:[#allocation8 + $0x1a0] sm:$0xff] %v830
      %895 = vst [vmem:[#allocation8 + $0x1a8] sm:$0xff] %v831
      %896 = vst [vmem:[#allocation8 + $0x1b0] sm:$0xff] %v832
      %897 = vst [vmem:[#allocation8 + $0x1b8] sm:$0xff] %v833
      %898 = vst [vmem:[#allocation8 + $0x1c0] sm:$0xff] %v834
      %899 = vst [vmem:[#allocation8 + $0x1c8] sm:$0xff] %v835
      %900 = vst [vmem:[#allocation8 + $0x1d0] sm:$0xff] %v836
      %901 = vst [vmem:[#allocation8 + $0x1d8] sm:$0xff] %v837
      %902 = vst [vmem:[#allocation8 + $0x1e0] sm:$0xff] %v838
      %903 = vst [vmem:[#allocation8 + $0x1e8] sm:$0xff] %v839
      %904 = vst [vmem:[#allocation8 + $0x1f0] sm:$0xff] %v840
      %905 = vst [vmem:[#allocation8 + $0x1f8] sm:$0xff] %v841
    $region29: #{tpu_custom_call.1} parent=1 // pred_fallthru
      _
    // Predicated region
    $region30: #{tpu_custom_call.1} parent=1 // pred_check
      _
    $region31: #{tpu_custom_call.1} parent=1 // pred_check_branch
      %907 = sbr.rel (0) target = $region33
    $region32: #{tpu_custom_call.1} parent=1 // pred_region
      %s909 = ssub.s32 8192, 8192
      %910 = vsyncadd [#allocation5], %s909
      %s911 = sshll.u32 [#allocation8], 4
      %s912 = int_to_ptr.vmem [resolvable:$true] %s911
      %917 = dma.vmem_to_hbm [thread:$0]  %s912, 8192, %s3, [#allocation5], 128, 128, 8
    $region33: #{tpu_custom_call.1} parent=1 // pred_fallthru
      _
    // Predicated region
    $region34: #{tpu_custom_call.1} parent=1 // pred_check
      _
    $region35: #{tpu_custom_call.1} parent=1 // pred_check_branch
      %919 = sbr.rel (0) target = $region37
    $region36: #{tpu_custom_call.1} parent=1 // pred_region
      %920 = dma.done [#allocation5], 8192
    $region37: #{tpu_custom_call.1} parent=1 // pred_fallthru
      _
    %921 = vsyncpa [#allocation4], 1
    %922 = vsyncpa [#allocation7], 1
    %923 = vsyncpa [#allocation5], 1

</llo_original>
